<compile_context>
chip_gen: v7x
topology: tpu7x:2x2x1
jax: 0.10.0
libtpu: 0.0.40
codegen_flags: <defaults>
</compile_context>

<pallas_src>
import math

import jax
import jax.numpy as jnp
from jax.experimental import pallas as pl
from jax.experimental.pallas import tpu as pltpu

LANES = 128


def _eltwise_sub_kernel(*refs):
    # refs = (in_ref_0, ..., in_ref_{n-1}, out_ref)
    in_refs, out_ref = refs[:-1], refs[-1]
    res = in_refs[0][...]
    for r in in_refs[1:]:
        res = res - r[...]
    out_ref[...] = res


def _round_up(x, m):
    return ((x + m - 1) // m) * m


def _sublane_multiple(dtype):
    # 8 for 4-byte, 16 for 2-byte (bf16), 32 for 1-byte (int8/fp8).
    return max(8, 32 // jnp.dtype(dtype).itemsize)


def _vmem_capacity_bytes():
    try:
        return int(pltpu.get_tpu_info().vmem_capacity_bytes)
    except Exception:
        return 64 * 1024 * 1024  # conservative: v7x per-TensorCore VMEM


def eltwise_sub(*inputs):
    """res = inputs[0] - inputs[1] - ... - inputs[-1]; all same shape/dtype."""
    assert len(inputs) >= 1
    shape = inputs[0].shape
    dtype = inputs[0].dtype
    for t in inputs[1:]:
        assert t.shape == shape and t.dtype == dtype
    if len(inputs) == 1:
        return inputs[0]

    n_in = len(inputs)
    itemsize = jnp.dtype(dtype).itemsize
    sub = _sublane_multiple(dtype)
    n_elem = math.prod(shape)

    # ---- build lane-dense (n_rows, 128) slabs -------------------------------
    aligned = n_elem > 0 and (n_elem % (LANES * sub) == 0)
    if aligned:
        # Metadata-only: no HBM copies in the wrapper.
        n_rows = n_elem // LANES
        slabs = [t.reshape(n_rows, LANES) for t in inputs]
    else:
        # TODO(synk): ragged tail handled by pad + final slice (one extra HBM
        # copy per array); could be replaced by an in-kernel masked tail block.
        n_rows = _round_up(pl.cdiv(n_elem, LANES), sub)
        padded = n_rows * LANES

        def to_slab(t):
            flat = t.reshape(-1)
            flat = jnp.pad(flat, (0, padded - n_elem))
            return flat.reshape(n_rows, LANES)

        slabs = [to_slab(t) for t in inputs]

    # ---- block sizing: maximize bytes/block under a VMEM budget -------------
    vmem_cap = _vmem_capacity_bytes()
    vmem_budget = int(vmem_cap * 0.75)
    # (n_in + 1) logical buffers, each double-buffered by the Pallas pipeline.
    block_bytes_cap = min(4 << 20, vmem_budget // (2 * (n_in + 1)))
    block_bytes_cap = max(block_bytes_cap, sub * LANES * itemsize)

    tile_r = max(sub, (block_bytes_cap // (LANES * itemsize)) // sub * sub)
    tile_r = min(tile_r, _round_up(n_rows, sub))

    # For large tensors make sure the grid has >= 2 steps so the "parallel"
    # axis can be sharded across both v7x TensorCores.
    if n_rows * LANES * itemsize >= (2 << 20):
        tile_r = min(tile_r, _round_up(pl.cdiv(n_rows, 2), sub))

    grid = (pl.cdiv(n_rows, tile_r),)
    spec = pl.BlockSpec((tile_r, LANES), lambda i: (i, 0))

    block_bytes = tile_r * LANES * itemsize
    vmem_limit = min(
        int(vmem_cap * 0.9),
        max(32 << 20, 2 * (n_in + 1) * block_bytes + (4 << 20)),
    )

    out_slab = pl.pallas_call(
        _eltwise_sub_kernel,
        out_shape=jax.ShapeDtypeStruct((n_rows, LANES), dtype),
        grid_spec=pltpu.PrefetchScalarGridSpec(
            num_scalar_prefetch=0,
            grid=grid,
            in_specs=[spec] * n_in,
            out_specs=spec,
        ),
        compiler_params=pltpu.CompilerParams(
            dimension_semantics=("parallel",),
            vmem_limit_bytes=vmem_limit,
        ),
    )(*slabs)

    if aligned:
        return out_slab.reshape(shape)
    return out_slab.reshape(-1)[:n_elem].reshape(shape)


if __name__ == "__main__":
    key = jax.random.PRNGKey(0)
    k0, k1, k2, k3, k4 = jax.random.split(key, 5)

    # 1) NCHW f32, element count aligned to 128*8 (copy-free fast path).
    shape = (2, 4, 16, 16)
    x0 = jax.random.normal(k0, shape, dtype=jnp.float32)
    x1 = jax.random.normal(k1, shape, dtype=jnp.float32)
    x2 = jax.random.normal(k2, shape, dtype=jnp.float32)
    out = jax.block_until_ready(eltwise_sub(x0, x1, x2))
    ref = x0 - x1 - x2
    assert out.shape == shape
    assert jnp.allclose(out, ref, atol=1e-6), "f32 aligned mismatch"

    # 2) Ragged f32 shape (exercises pad/slice fallback path).
    rshape = (3, 5, 7, 9)
    y0 = jax.random.normal(k3, rshape, dtype=jnp.float32)
    y1 = jax.random.normal(k4, rshape, dtype=jnp.float32)
    rout = jax.block_until_ready(eltwise_sub(y0, y1))
    assert rout.shape == rshape
    assert jnp.allclose(rout, y0 - y1, atol=1e-6), "f32 ragged mismatch"

    # 3) bf16 (exercises dtype-aware sublane multiple = 16).
    b0 = x0.astype(jnp.bfloat16)
    b1 = x1.astype(jnp.bfloat16)
    b2 = x2.astype(jnp.bfloat16)
    bout = jax.block_until_ready(eltwise_sub(b0, b1, b2))
    bref = (b0 - b1) - b2
    assert bout.shape == shape
    assert jnp.allclose(bout.astype(jnp.float32), bref.astype(jnp.float32),
                        atol=1e-2), "bf16 mismatch"

    print("KERNEL_OK")
</pallas_src>

<mosaic_0001>
module attributes {stable_mosaic.version = 11 : i64} {
  func.func @_eltwise_sub_kernel(%arg0: i32, %arg1: memref<16x128xf32, #tpu.memory_space<vmem>>, %arg2: memref<16x128xf32, #tpu.memory_space<vmem>>, %arg3: memref<16x128xf32, #tpu.memory_space<vmem>>, %arg4: memref<16x128xf32, #tpu.memory_space<vmem>>) attributes {dimension_semantics = [#tpu.dimension_semantics<parallel>], iteration_bounds = array<i64: 1>, scalar_prefetch = 0 : i64, scratch_operands = 0 : i64, tpu.core_type = #tpu.core_type<tc>, window_params = [{transform_indices = @transform_0, window_bounds = array<i64: 16, 128>}, {transform_indices = @transform_1, window_bounds = array<i64: 16, 128>}, {transform_indices = @transform_2, window_bounds = array<i64: 16, 128>}, {transform_indices = @transform_3, window_bounds = array<i64: 16, 128>}]} {
    %c0 = arith.constant 0 : index
    %c0_0 = arith.constant 0 : index
    %0 = vector.load %arg1[%c0, %c0_0] : memref<16x128xf32, #tpu.memory_space<vmem>>, vector<16x128xf32>
    %c0_1 = arith.constant 0 : index
    %c0_2 = arith.constant 0 : index
    %1 = vector.load %arg2[%c0_1, %c0_2] : memref<16x128xf32, #tpu.memory_space<vmem>>, vector<16x128xf32>
    %2 = arith.subf %0, %1 : vector<16x128xf32>
    %c0_3 = arith.constant 0 : index
    %c0_4 = arith.constant 0 : index
    %3 = vector.load %arg3[%c0_3, %c0_4] : memref<16x128xf32, #tpu.memory_space<vmem>>, vector<16x128xf32>
    %4 = arith.subf %2, %3 : vector<16x128xf32>
    %c0_5 = arith.constant 0 : index
    %c0_6 = arith.constant 0 : index
    %5 = vector.load %arg4[%c0_5, %c0_6] : memref<16x128xf32, #tpu.memory_space<vmem>>, vector<16x128xf32>
    tpu.vector_store %arg4[%c0_5, %c0_6], %4 {strides = array<i32>} : memref<16x128xf32, #tpu.memory_space<vmem>>, vector<16x128xf32>,
    return
  }
  func.func @transform_0(%arg0: i32) -> (i32, i32) {
    %c0_i32 = arith.constant 0 : i32
    %c0_i32_0 = arith.constant 0 : i32
    return %arg0, %c0_i32 : i32, i32
  }
  func.func @transform_1(%arg0: i32) -> (i32, i32) {
    %c0_i32 = arith.constant 0 : i32
    %c0_i32_0 = arith.constant 0 : i32
    return %arg0, %c0_i32 : i32, i32
  }
  func.func @transform_2(%arg0: i32) -> (i32, i32) {
    %c0_i32 = arith.constant 0 : i32
    %c0_i32_0 = arith.constant 0 : i32
    return %arg0, %c0_i32 : i32, i32
  }
  func.func @transform_3(%arg0: i32) -> (i32, i32) {
    %c0_i32 = arith.constant 0 : i32
    %c0_i32_0 = arith.constant 0 : i32
    return %arg0, %c0_i32 : i32, i32
  }
}

</mosaic_0001>

<llo_original>
// kernel: tpu_custom_call.1
$region0: #{tpu_custom_call.1}
  #allocation0 [shape = 'u32[]', space=smem, size = 0x4, offset = 0x4, fixed_abs, tag = 'smem constant byte address 0x4 - core index']
  #allocation1 [shape = 'u32[144,128]{1,0:T(1,128)}', space=vmem, size = 0x12000, scoped, tag = 'internal scratch']
  %s0 = inlined_call_operand.hbm [shape: f32[16,128], index: 0, kind: input, shape index: {}]
  %s1 = inlined_call_operand.hbm [shape: f32[16,128], index: 1, kind: input, shape index: {}]
  %s2 = inlined_call_operand.hbm [shape: f32[16,128], index: 2, kind: input, shape index: {}]
  %s3 = inlined_call_operand.hbm [shape: f32[16,128], index: 3, kind: output, shape index: {}]
  %s4 = sld [smem:[#allocation0]]
  $region34: #{tpu_custom_call.1} parent=0
    _
  %s6 = ssub.s32 1, %s4
  %s7 = scalar_select 0, %s6, %s4
  $region1: #{tpu_custom_call.1} parent=0
    #allocation2 [shape = 'u8[8192]{0}', space=vmem, size = 0x2000, scoped, tag = 'input window, operand 0, single buffered']
    #allocation3 [shape = 's32[1]{0}', space=sflag, size = 0x4, scoped, tag = 'scoped memory for tpu_custom_call.1']
    #allocation4 [shape = 's32[1]{0}', space=sflag, size = 0x4, scoped, tag = 'scoped memory for tpu_custom_call.1']
    #allocation5 [shape = 'u8[8192]{0}', space=vmem, size = 0x2000, scoped, tag = 'input window, operand 1, single buffered']
    #allocation6 [shape = 's32[1]{0}', space=sflag, size = 0x4, scoped, tag = 'scoped memory for tpu_custom_call.1']
    #allocation7 [shape = 'u8[8192]{0}', space=vmem, size = 0x2000, scoped, tag = 'input window, operand 2, single buffered']
    #allocation8 [shape = 'u8[8192]{0}', space=vmem, size = 0x2000, scoped, tag = 'output window, operand 0, single buffered']
    %8 = vsyncpa [#allocation3], 0
    %9 = vsyncpa [#allocation6], 0
    %10 = vsyncpa [#allocation4], 0
    // Predicated region
    $region2: #{tpu_custom_call.1} parent=1 // pred_check
      _
    $region3: #{tpu_custom_call.1} parent=1 // pred_check_branch
      %12 = sbr.rel (0) target = $region5
    $region4: #{tpu_custom_call.1} parent=1 // pred_region
      %s14 = ssub.s32 256, 256
      %15 = vsyncadd [#allocation3], %s14
      %s16 = sshll.u32 [#allocation2], 4
      %s17 = int_to_ptr.vmem [resolvable:$true] %s16
      %22 = dma.hbm_to_vmem [thread:$0]  %s0, 256, %s17, [#allocation3], 128, 128, 8
    $region5: #{tpu_custom_call.1} parent=1 // pred_fallthru
      _
    // Predicated region
    $region6: #{tpu_custom_call.1} parent=1 // pred_check
      _
    $region7: #{tpu_custom_call.1} parent=1 // pred_check_branch
      %24 = sbr.rel (0) target = $region9
    $region8: #{tpu_custom_call.1} parent=1 // pred_region
      %s26 = ssub.s32 256, 256
      %27 = vsyncadd [#allocation6], %s26
      %s28 = sshll.u32 [#allocation5], 4
      %s29 = int_to_ptr.vmem [resolvable:$true] %s28
      %34 = dma.hbm_to_vmem [thread:$0]  %s1, 256, %s29, [#allocation6], 128, 128, 8
    $region9: #{tpu_custom_call.1} parent=1 // pred_fallthru
      _
    // Predicated region
    $region10: #{tpu_custom_call.1} parent=1 // pred_check
      _
    $region11: #{tpu_custom_call.1} parent=1 // pred_check_branch
      %36 = sbr.rel (0) target = $region13
    $region12: #{tpu_custom_call.1} parent=1 // pred_region
      %s38 = ssub.s32 256, 256
      %39 = vsyncadd [#allocation6], %s38
      %s40 = sshll.u32 [#allocation7], 4
      %s41 = int_to_ptr.vmem [resolvable:$true] %s40
      %46 = dma.hbm_to_vmem [thread:$0]  %s2, 256, %s41, [#allocation6], 128, 128, 8
    $region13: #{tpu_custom_call.1} parent=1 // pred_fallthru
      _
    // Predicated region
    $region14: #{tpu_custom_call.1} parent=1 // pred_check
      _
    $region15: #{tpu_custom_call.1} parent=1 // pred_check_branch
      %48 = sbr.rel (0) target = $region17
    $region16: #{tpu_custom_call.1} parent=1 // pred_region
      %49 = dma.done [#allocation3], 256
    $region17: #{tpu_custom_call.1} parent=1 // pred_fallthru
      _
    // Predicated region
    $region18: #{tpu_custom_call.1} parent=1 // pred_check
      _
    $region19: #{tpu_custom_call.1} parent=1 // pred_check_branch
      %51 = sbr.rel (0) target = $region21
    $region20: #{tpu_custom_call.1} parent=1 // pred_region
      %52 = dma.done [#allocation6], 256
    $region21: #{tpu_custom_call.1} parent=1 // pred_fallthru
      _
    // Predicated region
    $region22: #{tpu_custom_call.1} parent=1 // pred_check
      _
    $region23: #{tpu_custom_call.1} parent=1 // pred_check_branch
      %54 = sbr.rel (0) target = $region25
    $region24: #{tpu_custom_call.1} parent=1 // pred_region
      %55 = dma.done [#allocation6], 256
    $region25: #{tpu_custom_call.1} parent=1 // pred_fallthru
      _
    %v56 = vld [vmem:[#allocation2] sm:$0xff]
    %v57 = vld [vmem:[#allocation2 + $0x8] sm:$0xff]
    %v58 = vld [vmem:[#allocation5] sm:$0xff]
    %v59 = vld [vmem:[#allocation5 + $0x8] sm:$0xff]
    %v60 = vsub.f32 %v56, %v58
    %v61 = vsub.f32 %v57, %v59
    %v62 = vld [vmem:[#allocation7] sm:$0xff]
    %v63 = vld [vmem:[#allocation7 + $0x8] sm:$0xff]
    %v64 = vsub.f32 %v60, %v62
    %v65 = vsub.f32 %v61, %v63
    %66 = vst [vmem:[#allocation8] sm:$0xff] %v64
    %67 = vst [vmem:[#allocation8 + $0x8] sm:$0xff] %v65
    // Predicated region
    $region26: #{tpu_custom_call.1} parent=1 // pred_check
      _
    $region27: #{tpu_custom_call.1} parent=1 // pred_check_branch
      %69 = sbr.rel (0) target = $region29
    $region28: #{tpu_custom_call.1} parent=1 // pred_region
      %s71 = ssub.s32 256, 256
      %72 = vsyncadd [#allocation4], %s71
      %s73 = sshll.u32 [#allocation8], 4
      %s74 = int_to_ptr.vmem [resolvable:$true] %s73
      %79 = dma.vmem_to_hbm [thread:$0]  %s74, 256, %s3, [#allocation4], 128, 128, 8
    $region29: #{tpu_custom_call.1} parent=1 // pred_fallthru
      _
    // Predicated region
    $region30: #{tpu_custom_call.1} parent=1 // pred_check
      _
    $region31: #{tpu_custom_call.1} parent=1 // pred_check_branch
      %81 = sbr.rel (0) target = $region33
    $region32: #{tpu_custom_call.1} parent=1 // pred_region
      %82 = dma.done [#allocation4], 256
    $region33: #{tpu_custom_call.1} parent=1 // pred_fallthru
      _
    %83 = vsyncpa [#allocation3], 1
    %84 = vsyncpa [#allocation6], 1
    %85 = vsyncpa [#allocation4], 1

</llo_original>
